<compile_context>
chip_gen: v5e
topology: v5e:2x2
jax: 0.10.0
libtpu: 0.0.40
codegen_flags: <defaults>
</compile_context>

<pallas_src>
import functools
import math

import jax
import jax.numpy as jnp
from jax.experimental import pallas as pl
from jax.experimental.pallas import tpu as pltpu


_MIN_GRID_STEPS = 4  # >= 2 grid steps per TensorCore on dual-TC chips (v7x)


# ---------------------------------------------------------------------------
# LayerNorm kernels (plain and fused residual-add + LayerNorm)
# ---------------------------------------------------------------------------

def _refined_reciprocal(denom):
    # EUP approximate reciprocal + 2 Newton-Raphson steps on the tiny per-row
    # stats vector: keeps the divide off the VPU at full f32 accuracy.
    inv = pl.reciprocal(denom, approx=True)
    inv = inv * (jnp.float32(2.0) - denom * inv)
    inv = inv * (jnp.float32(2.0) - denom * inv)
    return inv


def _ln_body(x, g_ref, b_ref, o_ref, *, eps, hidden, k):
    # x: (tile, k*hidden) float32.  Each row holds k independent LayerNorm
    # segments of length `hidden` (lane-dense fold: k*hidden % 128 == 0).
    width = k * hidden
    inv_nm1 = jnp.float32(1.0 / (hidden - 1))   # unbiased (torch .std default)
    eps32 = jnp.float32(eps)

    if k == 1:
        mean = jnp.mean(x, axis=-1, keepdims=True)
        xc = x - mean
        var = jnp.sum(xc * xc, axis=-1, keepdims=True) * inv_nm1
        denom = jnp.sqrt(var) + eps32
        inv_b = _refined_reciprocal(denom)       # (tile, 1), broadcasts in FMA
    else:
        # One-hot segment matrices built from iota (no integer division so the
        # comparison stays cheap VPU work); reductions/broadcasts run on the
        # MXU, which is otherwise idle in this HBM-bound kernel.
        col_r = jax.lax.broadcasted_iota(jnp.int32, (width, k), 0)
        seg_r = jax.lax.broadcasted_iota(jnp.int32, (width, k), 1)
        s_reduce = ((col_r >= seg_r * hidden) &
                    (col_r < (seg_r + 1) * hidden)).astype(jnp.float32)   # (width, k)
        seg_b = jax.lax.broadcasted_iota(jnp.int32, (k, width), 0)
        col_b = jax.lax.broadcasted_iota(jnp.int32, (k, width), 1)
        s_bcast = ((col_b >= seg_b * hidden) &
                   (col_b < (seg_b + 1) * hidden)).astype(jnp.float32)    # (k, width)

        sums = jnp.dot(x, s_reduce, preferred_element_type=jnp.float32)   # (tile, k)
        mean = sums * jnp.float32(1.0 / hidden)
        xc = x - jnp.dot(mean, s_bcast, preferred_element_type=jnp.float32)
        var = jnp.dot(xc * xc, s_reduce,
                      preferred_element_type=jnp.float32) * inv_nm1       # (tile, k)
        denom = jnp.sqrt(var) + eps32
        inv = _refined_reciprocal(denom)                                  # (tile, k)
        inv_b = jnp.dot(inv, s_bcast, preferred_element_type=jnp.float32) # (tile, width)

    # bf16 epilogue on bf16 outputs (v6e/v7x have bf16 VALUs); reductions above
    # stayed f32 so accuracy impact is negligible.
    cd = jnp.bfloat16 if o_ref.dtype == jnp.bfloat16 else jnp.float32
    g = g_ref[...].astype(cd)
    b = b_ref[...].astype(cd)
    o_ref[...] = (xc.astype(cd) * inv_b.astype(cd) * g + b).astype(o_ref.dtype)


def _ln_kernel(x_ref, g_ref, b_ref, o_ref, *, eps, hidden, k):
    _ln_body(x_ref[...].astype(jnp.float32), g_ref, b_ref, o_ref,
             eps=eps, hidden=hidden, k=k)


def _add_ln_kernel(x_ref, r_ref, g_ref, b_ref, o_ref, *, eps, hidden, k):
    x = x_ref[...].astype(jnp.float32) + r_ref[...].astype(jnp.float32)
    _ln_body(x, g_ref, b_ref, o_ref, eps=eps, hidden=hidden, k=k)


# ---------------------------------------------------------------------------
# Tiling / VMEM policy
# ---------------------------------------------------------------------------

def _vmem_budget():
    """(tile working-set budget, vmem_limit_bytes), generation-aware."""
    try:
        cap = pltpu.get_tpu_info().vmem_capacity_bytes
    except Exception:
        cap = 64 * 1024 * 1024                       # conservative (v7x per-TC)
    if cap <= 64 * 1024 * 1024:                      # v7x: 64 MiB physical
        return 20 * 1024 * 1024, 40 * 1024 * 1024
    return 32 * 1024 * 1024, 56 * 1024 * 1024        # v5e / v6e: 128 MiB


def _choose_tile_rows(frows, width, itemsize, n_streams, budget):
    """Largest (folded-)row tile that fits the VMEM budget, with at least
    _MIN_GRID_STEPS grid steps when rows permit.  Budget accounts for both
    the double-buffered streamed dtype bytes AND the f32 working set created
    by the in-kernel upcast (~5 tile-sized f32 temporaries)."""
    sub = {4: 8, 2: 16, 1: 32}.get(itemsize, 8)      # sublane packing per dtype
    if frows <= sub:
        return frows                                  # single full-extent block
    per_frow = 2 * n_streams * width * itemsize + 5 * width * 4
    budget_rows = max(sub, budget // max(per_frow, 1))
    step_cap = -(-frows // _MIN_GRID_STEPS)           # keep both TCs busy (v7x)
    step_cap = ((step_cap + sub - 1) // sub) * sub
    frows_rounded = ((frows + sub - 1) // sub) * sub
    tile = min(budget_rows, max(step_cap, sub), frows_rounded)
    return max(sub, (tile // sub) * sub)


def _run_layernorm(x, residual, gamma, beta, eps):
    orig_shape = x.shape
    hidden = orig_shape[-1]
    x2 = x.reshape(-1, hidden)
    r2 = residual.reshape(-1, hidden) if residual is not None else None
    rows = x2.shape[0]
    itemsize = jnp.dtype(x.dtype).itemsize

    # Lane-dense fold: view (rows, hidden) as (rows/k, k*hidden) with
    # k*hidden a multiple of 128 so stores are never lane-masked.
    k = 128 // math.gcd(hidden, 128)
    width = k * hidden
    frows = -(-rows // k)
    pad = frows * k - rows
    if pad:                                           # at most k-1 rows of zeros
        x2 = jnp.pad(x2, ((0, pad), (0, 0)))
        if r2 is not None:
            r2 = jnp.pad(r2, ((0, pad), (0, 0)))
    xf = x2.reshape(frows, width)
    rf = r2.reshape(frows, width) if r2 is not None else None
    gf = jnp.tile(gamma.reshape(1, hidden), (1, k))
    bf = jnp.tile(beta.reshape(1, hidden), (1, k))

    n_streams = 3 if rf is not None else 2            # row-tiled HBM streams
    budget, vmem_limit = _vmem_budget()
    tile = _choose_tile_rows(frows, width, itemsize, n_streams, budget)
    grid = (-(-frows // tile),)   # ragged last block: Pallas masks the writeback

    row_spec = pl.BlockSpec((tile, width), lambda i: (i, 0))
    par_spec = pl.BlockSpec((1, width), lambda i: (0, 0))

    if rf is not None:
        kernel = functools.partial(_add_ln_kernel, eps=eps, hidden=hidden, k=k)
        in_specs = [row_spec, row_spec, par_spec, par_spec]
        operands = (xf, rf, gf, bf)
    else:
        kernel = functools.partial(_ln_kernel, eps=eps, hidden=hidden, k=k)
        in_specs = [row_spec, par_spec, par_spec]
        operands = (xf, gf, bf)

    out = pl.pallas_call(
        kernel,
        out_shape=jax.ShapeDtypeStruct((frows, width), x.dtype),
        grid_spec=pltpu.PrefetchScalarGridSpec(
            num_scalar_prefetch=0,
            grid=grid,
            in_specs=in_specs,
            out_specs=row_spec,
        ),
        compiler_params=pltpu.CompilerParams(
            dimension_semantics=("parallel",),
            vmem_limit_bytes=vmem_limit,
        ),
    )(*operands)

    out = out.reshape(frows * k, hidden)
    if pad:
        out = out[:rows]
    return out.reshape(orig_shape)


def layer_norm(x, gamma, beta, eps=1e-6):
    """LayerNorm over the last axis (torch-style: unbiased std, eps on std)."""
    return _run_layernorm(x, None, gamma, beta, eps)


def add_layer_norm(x, residual, gamma, beta, eps=1e-6):
    """Fused LayerNorm(x + residual): one fewer HBM round-trip."""
    return _run_layernorm(x, residual, gamma, beta, eps)


# ---------------------------------------------------------------------------
# Block.forward wrapper (SA -> residual -> AttFlat -> residual + LayerNorm).
# Dense projections / softmax attention run as plain jnp (XLA) ops; all
# LayerNorm sites go through the fused Pallas kernel above.
# Dropout layers are identity (eval mode / dropout_r = 0).
# ---------------------------------------------------------------------------

def _linear(x, w, b):
    return jnp.dot(x, w) + b


def _mlp(x, p):  # FC(relu) followed by Linear, as in MLP
    return _linear(jax.nn.relu(_linear(x, p["w1"], p["b1"])), p["w2"], p["b2"])


def _mhatt(v_in, k_in, q_in, mask, p, heads):
    B, S, H = q_in.shape
    dh = H // heads

    def split(t):
        return t.reshape(B, -1, heads, dh).transpose(0, 2, 1, 3)

    q = split(_linear(q_in, p["wq"], p["bq"]))
    k = split(_linear(k_in, p["wk"], p["bk"]))
    v = split(_linear(v_in, p["wv"], p["bv"]))
    scores = jnp.einsum("bhqd,bhkd->bhqk", q, k) / math.sqrt(dh)
    if mask is not None:
        scores = jnp.where(mask, -1e9, scores)
    att = jax.nn.softmax(scores, axis=-1)
    out = jnp.einsum("bhqk,bhkd->bhqd", att, v)
    out = out.transpose(0, 2, 1, 3).reshape(B, -1, H)
    return _linear(out, p["wm"], p["bm"])


def _sa(x, mask, p, heads, ln_fn):
    x = ln_fn(_mhatt(x, x, x, mask, p["mhatt"], heads), x,
              p["norm1_g"], p["norm1_b"])
    x = ln_fn(_mlp(x, p["ffn"]), x, p["norm2_g"], p["norm2_b"])
    return x


def _att_flat(x, mask, p):
    att = _mlp(x, p["mlp"])                                # (B, S, glimpse)
    if mask is not None:
        att = jnp.where(mask[:, 0, 0, :][..., None], -1e9, att)
    att = jax.nn.softmax(att, axis=1)
    return jnp.einsum("bsg,bsh->bgh", att, x)              # stacked glimpses


def block_forward(x, x_mask, params, heads, ln_fn):
    # Block.forward for a non-last layer (sa3/SGA is unused in Block.forward).
    ax = _sa(x, x_mask, params["sa1"], heads, ln_fn)
    x = ax + x
    ax = _att_flat(x, x_mask, params["att"])
    return ln_fn(ax, x, params["norm_g"], params["norm_b"])


# ---------------------------------------------------------------------------
# Deterministic parameter init + pure-jnp reference for correctness checking
# ---------------------------------------------------------------------------

def _init_linear(key, in_size, out_size):
    k1, k2 = jax.random.split(key)
    bound = 1.0 / math.sqrt(in_size)
    w = jax.random.uniform(k1, (in_size, out_size), jnp.float32, -bound, bound)
    b = jax.random.uniform(k2, (out_size,), jnp.float32, -bound, bound)
    return w, b


def init_block_params(key, hidden, ff, glimpse):
    ks = iter(jax.random.split(key, 8))
    mh = {}
    mh["wq"], mh["bq"] = _init_linear(next(ks), hidden, hidden)
    mh["wk"], mh["bk"] = _init_linear(next(ks), hidden, hidden)
    mh["wv"], mh["bv"] = _init_linear(next(ks), hidden, hidden)
    mh["wm"], mh["bm"] = _init_linear(next(ks), hidden, hidden)
    ffn = {}
    ffn["w1"], ffn["b1"] = _init_linear(next(ks), hidden, ff)
    ffn["w2"], ffn["b2"] = _init_linear(next(ks), ff, hidden)
    att_mlp = {}
    att_mlp["w1"], att_mlp["b1"] = _init_linear(next(ks), hidden, ff)
    att_mlp["w2"], att_mlp["b2"] = _init_linear(next(ks), ff, glimpse)
    ones = jnp.ones((hidden,), jnp.float32)
    zeros = jnp.zeros((hidden,), jnp.float32)
    return {
        "sa1": {"mhatt": mh, "ffn": ffn,
                "norm1_g": ones, "norm1_b": zeros,
                "norm2_g": ones, "norm2_b": zeros},
        "att": {"mlp": att_mlp},
        "norm_g": ones, "norm_b": zeros,
    }


def _add_ln_ref(x, residual, gamma, beta, eps=1e-6):
    xf = x.astype(jnp.float32) + residual.astype(jnp.float32)
    mean = jnp.mean(xf, axis=-1, keepdims=True)
    var = jnp.sum((xf - mean) ** 2, axis=-1, keepdims=True) / (x.shape[-1] - 1)
    std = jnp.sqrt(var)
    return (gamma * (xf - mean) / (std + eps) + beta).astype(x.dtype)


if __name__ == "__main__":
    key = jax.random.PRNGKey(0)
    batch, seq, hidden, ff, heads = 2, 8, 32, 64, 4

    kx, kp, k3, k4, k5 = jax.random.split(key, 5)
    x = jax.random.normal(kx, (batch, seq, hidden), dtype=jnp.float32)
    # x_mask: True = padded key position; shape (B, 1, 1, S) as in PyTorch use.
    x_mask = jnp.zeros((batch, 1, 1, seq), dtype=bool).at[1, 0, 0, seq - 2:].set(True)
    params = init_block_params(kp, hidden, ff, glimpse=seq)

    # 1) Standalone LayerNorm (hidden=32 -> lane-dense fold, k=4).
    gamma = jnp.ones((hidden,), jnp.float32)
    beta = jnp.zeros((hidden,), jnp.float32)
    y = jax.block_until_ready(layer_norm(x, gamma, beta, eps=1e-6))
    y_ref = _add_ln_ref(x, jnp.zeros_like(x), gamma, beta, eps=1e-6)
    assert y.shape == x.shape
    assert jnp.allclose(y, y_ref, atol=1e-5, rtol=1e-5), "LayerNorm mismatch"

    # 2) Full Block.forward: Pallas fused add+LN vs pure-jnp LayerNorms.
    # TODO(synk): dropout is treated as identity (eval mode, dropout_r=0).
    out = jax.block_until_ready(
        block_forward(x, x_mask, params, heads, ln_fn=add_layer_norm))
    out_ref = block_forward(x, x_mask, params, heads, ln_fn=_add_ln_ref)
    assert out.shape == (batch, seq, hidden)
    assert jnp.allclose(out, out_ref, atol=2e-4, rtol=2e-4), "Block mismatch"

    # 3) Ragged grid check (rows % tile_rows != 0) with hidden % 128 == 0 (k=1):
    #    21 rows, tile 8 -> masked writeback of the partial last block.
    xr = jax.random.normal(k3, (3, 7, 256), dtype=jnp.float32)
    rr = jax.random.normal(k4, (3, 7, 256), dtype=jnp.float32)
    g2 = 1.0 + 0.1 * jax.random.normal(k5, (256,), dtype=jnp.float32)
    b2 = 0.05 * jnp.ones((256,), jnp.float32)
    yr = jax.block_until_ready(add_layer_norm(xr, rr, g2, b2, eps=1e-6))
    yr_ref = _add_ln_ref(xr, rr, g2, b2, eps=1e-6)
    assert jnp.allclose(yr, yr_ref, atol=1e-5, rtol=1e-5), "Ragged-grid mismatch"

    # 4) bf16 inputs with lane-dense fold (hidden=160 -> k=4) and bf16 epilogue.
    xb = jax.random.normal(k3, (2, 12, 160), dtype=jnp.float32).astype(jnp.bfloat16)
    rb = jax.random.normal(k4, (2, 12, 160), dtype=jnp.float32).astype(jnp.bfloat16)
    gb = jnp.ones((160,), jnp.float32)
    bb = jnp.zeros((160,), jnp.float32)
    yb = jax.block_until_ready(add_layer_norm(xb, rb, gb, bb, eps=1e-6))
    yb_ref = _add_ln_ref(xb, rb, gb, bb, eps=1e-6)
    assert jnp.allclose(yb.astype(jnp.float32), yb_ref.astype(jnp.float32),
                        atol=0.15, rtol=0.05), "bf16 LayerNorm mismatch"

    print("KERNEL_OK")
</pallas_src>

<mosaic_0001>
module attributes {stable_mosaic.version = 11 : i64} {
  func.func @_ln_kernel(%arg0: i32, %arg1: memref<4x128xf32, #tpu.memory_space<vmem>>, %arg2: memref<1x128xf32, #tpu.memory_space<vmem>>, %arg3: memref<1x128xf32, #tpu.memory_space<vmem>>, %arg4: memref<4x128xf32, #tpu.memory_space<vmem>>) attributes {dimension_semantics = [#tpu.dimension_semantics<parallel>], iteration_bounds = array<i64: 1>, scalar_prefetch = 0 : i64, scratch_operands = 0 : i64, tpu.core_type = #tpu.core_type<tc>, window_params = [{transform_indices = @transform_0, window_bounds = array<i64: 4, 128>}, {pipeline_mode = #tpu.pipeline_mode<synchronous>, transform_indices = @transform_1, window_bounds = array<i64: 1, 128>}, {pipeline_mode = #tpu.pipeline_mode<synchronous>, transform_indices = @transform_2, window_bounds = array<i64: 1, 128>}, {transform_indices = @transform_3, window_bounds = array<i64: 4, 128>}]} {
    %c0 = arith.constant 0 : index
    %c0_0 = arith.constant 0 : index
    %0 = vector.load %arg1[%c0, %c0_0] : memref<4x128xf32, #tpu.memory_space<vmem>>, vector<4x128xf32>
    %1 = tpu.iota {dimensions = array<i32: 0>} : vector<128x4xi32>
    %2 = tpu.iota {dimensions = array<i32: 1>} : vector<128x4xi32>
    %c32_i32 = arith.constant 32 : i32
    %3 = vector.broadcast %c32_i32 : i32 to vector<128x4xi32>
    %4 = arith.muli %2, %3 : vector<128x4xi32>
    %5 = arith.cmpi sge, %1, %4 : vector<128x4xi32>
    %c1_i32 = arith.constant 1 : i32
    %6 = vector.broadcast %c1_i32 : i32 to vector<128x4xi32>
    %7 = arith.addi %2, %6 : vector<128x4xi32>
    %c32_i32_1 = arith.constant 32 : i32
    %8 = vector.broadcast %c32_i32_1 : i32 to vector<128x4xi32>
    %9 = arith.muli %7, %8 : vector<128x4xi32>
    %10 = arith.cmpi slt, %1, %9 : vector<128x4xi32>
    %11 = arith.andi %5, %10 : vector<128x4xi1>
    %12 = arith.extui %11 : vector<128x4xi1> to vector<128x4xi32>
    %13 = arith.sitofp %12 : vector<128x4xi32> to vector<128x4xf32>
    %14 = tpu.iota {dimensions = array<i32: 0>} : vector<4x128xi32>
    %15 = tpu.iota {dimensions = array<i32: 1>} : vector<4x128xi32>
    %c32_i32_2 = arith.constant 32 : i32
    %16 = vector.broadcast %c32_i32_2 : i32 to vector<4x128xi32>
    %17 = arith.muli %14, %16 : vector<4x128xi32>
    %18 = arith.cmpi sge, %15, %17 : vector<4x128xi32>
    %c1_i32_3 = arith.constant 1 : i32
    %19 = vector.broadcast %c1_i32_3 : i32 to vector<4x128xi32>
    %20 = arith.addi %14, %19 : vector<4x128xi32>
    %c32_i32_4 = arith.constant 32 : i32
    %21 = vector.broadcast %c32_i32_4 : i32 to vector<4x128xi32>
    %22 = arith.muli %20, %21 : vector<4x128xi32>
    %23 = arith.cmpi slt, %15, %22 : vector<4x128xi32>
    %24 = arith.andi %18, %23 : vector<4x128xi1>
    %25 = arith.extui %24 : vector<4x128xi1> to vector<4x128xi32>
    %26 = arith.sitofp %25 : vector<4x128xi32> to vector<4x128xf32>
    %cst = arith.constant dense<0.000000e+00> : vector<4x4xf32>
    %27 = tpu.matmul %0, %13, %cst {dimension_numbers = #tpu.dot_dimension_numbers<[1], [0], [0], [1], [0, 0, 1, 1], [], []>} : vector<4x128xf32>, vector<128x4xf32>, vector<4x4xf32> -> vector<4x4xf32>
    %cst_5 = arith.constant 3.125000e-02 : f32
    %28 = vector.broadcast %cst_5 : f32 to vector<4x4xf32>
    %29 = arith.mulf %27, %28 : vector<4x4xf32>
    %cst_6 = arith.constant dense<0.000000e+00> : vector<4x128xf32>
    %30 = tpu.matmul %29, %26, %cst_6 {dimension_numbers = #tpu.dot_dimension_numbers<[1], [0], [0], [1], [0, 0, 1, 1], [], []>} : vector<4x4xf32>, vector<4x128xf32>, vector<4x128xf32> -> vector<4x128xf32>
    %31 = arith.subf %0, %30 : vector<4x128xf32>
    %32 = arith.mulf %31, %31 : vector<4x128xf32>
    %cst_7 = arith.constant dense<0.000000e+00> : vector<4x4xf32>
    %33 = tpu.matmul %32, %13, %cst_7 {dimension_numbers = #tpu.dot_dimension_numbers<[1], [0], [0], [1], [0, 0, 1, 1], [], []>} : vector<4x128xf32>, vector<128x4xf32>, vector<4x4xf32> -> vector<4x4xf32>
    %cst_8 = arith.constant 0.0322580636 : f32
    %34 = vector.broadcast %cst_8 : f32 to vector<4x4xf32>
    %35 = arith.mulf %33, %34 : vector<4x4xf32>
    %36 = math.sqrt %35 : vector<4x4xf32>
    %cst_9 = arith.constant 9.99999997E-7 : f32
    %37 = vector.broadcast %cst_9 : f32 to vector<4x4xf32>
    %38 = arith.addf %36, %37 : vector<4x4xf32>
    %39 = tpu.reciprocal %38 {approx = true} : vector<4x4xf32> -> vector<4x4xf32>
    %40 = arith.mulf %38, %39 : vector<4x4xf32>
    %cst_10 = arith.constant 2.000000e+00 : f32
    %41 = vector.broadcast %cst_10 : f32 to vector<4x4xf32>
    %42 = arith.subf %41, %40 : vector<4x4xf32>
    %43 = arith.mulf %39, %42 : vector<4x4xf32>
    %44 = arith.mulf %38, %43 : vector<4x4xf32>
    %cst_11 = arith.constant 2.000000e+00 : f32
    %45 = vector.broadcast %cst_11 : f32 to vector<4x4xf32>
    %46 = arith.subf %45, %44 : vector<4x4xf32>
    %47 = arith.mulf %43, %46 : vector<4x4xf32>
    %cst_12 = arith.constant dense<0.000000e+00> : vector<4x128xf32>
    %48 = tpu.matmul %47, %26, %cst_12 {dimension_numbers = #tpu.dot_dimension_numbers<[1], [0], [0], [1], [0, 0, 1, 1], [], []>} : vector<4x4xf32>, vector<4x128xf32>, vector<4x128xf32> -> vector<4x128xf32>
    %c0_13 = arith.constant 0 : index
    %c0_14 = arith.constant 0 : index
    %49 = vector.load %arg2[%c0_13, %c0_14] : memref<1x128xf32, #tpu.memory_space<vmem>>, vector<1x128xf32>
    %c0_15 = arith.constant 0 : index
    %c0_16 = arith.constant 0 : index
    %50 = vector.load %arg3[%c0_15, %c0_16] : memref<1x128xf32, #tpu.memory_space<vmem>>, vector<1x128xf32>
    %51 = arith.mulf %31, %48 : vector<4x128xf32>
    %52 = vector.broadcast %49 : vector<1x128xf32> to vector<4x128xf32>
    %53 = arith.mulf %51, %52 : vector<4x128xf32>
    %54 = vector.broadcast %50 : vector<1x128xf32> to vector<4x128xf32>
    %55 = arith.addf %53, %54 : vector<4x128xf32>
    %c0_17 = arith.constant 0 : index
    %c0_18 = arith.constant 0 : index
    %56 = vector.load %arg4[%c0_17, %c0_18] : memref<4x128xf32, #tpu.memory_space<vmem>>, vector<4x128xf32>
    tpu.vector_store %arg4[%c0_17, %c0_18], %55 {strides = array<i32>} : memref<4x128xf32, #tpu.memory_space<vmem>>, vector<4x128xf32>,
    return
  }
  func.func @transform_0(%arg0: i32) -> (i32, i32) {
    %c0_i32 = arith.constant 0 : i32
    %c0_i32_0 = arith.constant 0 : i32
    return %arg0, %c0_i32 : i32, i32
  }
  func.func @transform_1(%arg0: i32) -> (i32, i32) {
    %c0_i32 = arith.constant 0 : i32
    %c0_i32_0 = arith.constant 0 : i32
    %c0_i32_1 = arith.constant 0 : i32
    return %c0_i32, %c0_i32_0 : i32, i32
  }
  func.func @transform_2(%arg0: i32) -> (i32, i32) {
    %c0_i32 = arith.constant 0 : i32
    %c0_i32_0 = arith.constant 0 : i32
    %c0_i32_1 = arith.constant 0 : i32
    return %c0_i32, %c0_i32_0 : i32, i32
  }
  func.func @transform_3(%arg0: i32) -> (i32, i32) {
    %c0_i32 = arith.constant 0 : i32
    %c0_i32_0 = arith.constant 0 : i32
    return %arg0, %c0_i32 : i32, i32
  }
}

</mosaic_0001>

<llo_original>
// kernel: tpu_custom_call.1
$region0: #{tpu_custom_call.1}
  #allocation0 [shape = 'u32[]', space=smem, size = 0x4, offset = 0x4, fixed_abs, tag = 'smem constant byte address 0x4 - core index']
  #allocation1 [shape = 'u32[72,128]{1,0:T(1,128)}', space=vmem, size = 0x9000, scoped, tag = 'internal scratch']
  %s0 = inlined_call_operand.hbm [shape: f32[4,128], index: 0, kind: input, shape index: {}]
  %s1 = inlined_call_operand.hbm [shape: f32[1,128], index: 1, kind: input, shape index: {}]
  %s2 = inlined_call_operand.vmem [shape: f32[1,128], index: 2, kind: input, shape index: {}]
  %s3 = inlined_call_operand.hbm [shape: f32[4,128], index: 3, kind: output, shape index: {}]
  %s4 = sld [smem:[#allocation0]]
  $region30: #{tpu_custom_call.1} parent=0
    _
  %s6 = ssub.s32 1, %s4
  %s7 = scalar_select 0, %s6, %s4
  $region1: #{tpu_custom_call.1} parent=0
    #allocation2 [shape = 'u8[2048]{0}', space=vmem, size = 0x800, scoped, tag = 'input window, operand 0, single buffered']
    #allocation3 [shape = 's32[1]{0}', space=sflag, size = 0x4, scoped, tag = 'scoped memory for tpu_custom_call.1']
    #allocation4 [shape = 's32[1]{0}', space=sflag, size = 0x4, scoped, tag = 'scoped memory for tpu_custom_call.1']
    #allocation5 [shape = 'u8[512]{0}', space=vmem, size = 0x400, scoped, tag = 'input window, operand 1, single buffered']
    #allocation6 [shape = 's32[1]{0}', space=sflag, size = 0x4, scoped, tag = 'scoped memory for tpu_custom_call.1']
    #allocation7 [shape = 'u8[2048]{0}', space=vmem, size = 0x800, scoped, tag = 'output window, operand 0, single buffered']
    %8 = vsyncpa [#allocation3], 0
    %9 = vsyncpa [#allocation6], 0
    %10 = vsyncpa [#allocation4], 0
    // Predicated region
    $region2: #{tpu_custom_call.1} parent=1 // pred_check
      _
    $region3: #{tpu_custom_call.1} parent=1 // pred_check_branch
      %12 = sbr.rel (0) target = $region5
    $region4: #{tpu_custom_call.1} parent=1 // pred_region
      %14 = vsyncadd [#allocation3], 0
      %s16 = sshll.u32 %s0, 4
      %s17 = int_to_ptr.hbm [resolvable:$true] %s16
      %s18 = sshll.u32 [#allocation2], 4
      %s19 = int_to_ptr.vmem [resolvable:$true] %s18
      %21 = dma.hbm_to_vmem [thread:$0]  %s17, 64, %s19, [#allocation3]
    $region5: #{tpu_custom_call.1} parent=1 // pred_fallthru
      _
    // Predicated region
    $region6: #{tpu_custom_call.1} parent=1 // pred_check
      _
    $region7: #{tpu_custom_call.1} parent=1 // pred_check_branch
      %23 = sbr.rel (0) target = $region9
    $region8: #{tpu_custom_call.1} parent=1 // pred_region
      %25 = vsyncadd [#allocation6], 0
      %s27 = sshll.u32 %s1, 4
      %s28 = int_to_ptr.hbm [resolvable:$true] %s27
      %s29 = sshll.u32 [#allocation5], 4
      %s30 = int_to_ptr.vmem [resolvable:$true] %s29
      %32 = dma.hbm_to_vmem [thread:$0]  %s28, 16, %s30, [#allocation6]
    $region9: #{tpu_custom_call.1} parent=1 // pred_fallthru
      _
    // Predicated region
    $region10: #{tpu_custom_call.1} parent=1 // pred_check
      _
    $region11: #{tpu_custom_call.1} parent=1 // pred_check_branch
      %34 = sbr.rel (0) target = $region13
    $region12: #{tpu_custom_call.1} parent=1 // pred_region
      _
    $region13: #{tpu_custom_call.1} parent=1 // pred_fallthru
      _
    // Predicated region
    $region14: #{tpu_custom_call.1} parent=1 // pred_check
      _
    $region15: #{tpu_custom_call.1} parent=1 // pred_check_branch
      %36 = sbr.rel (0) target = $region17
    $region16: #{tpu_custom_call.1} parent=1 // pred_region
      %38 = dma.done [#allocation3], 64
    $region17: #{tpu_custom_call.1} parent=1 // pred_fallthru
      _
    // Predicated region
    $region18: #{tpu_custom_call.1} parent=1 // pred_check
      _
    $region19: #{tpu_custom_call.1} parent=1 // pred_check_branch
      %40 = sbr.rel (0) target = $region21
    $region20: #{tpu_custom_call.1} parent=1 // pred_region
      %42 = dma.done [#allocation6], 16
    $region21: #{tpu_custom_call.1} parent=1 // pred_fallthru
      _
    %v43 = vld [vmem:[#allocation2] sm:$0xf]
    %v44 = vlaneseq
    %v45 = vshrl.u32 %v44, 7
    %v46 = vadd.s32 %v45, 8
    %v47 = vadd.s32 %v45, 16
    %v48 = vadd.s32 %v45, 24
    %v49 = vadd.s32 %v45, 32
    %v50 = vadd.s32 %v45, 40
    %v51 = vadd.s32 %v45, 48
    %v52 = vadd.s32 %v45, 56
    %v53 = vadd.s32 %v45, 64
    %v54 = vadd.s32 %v45, 72
    %v55 = vadd.s32 %v45, 80
    %v56 = vadd.s32 %v45, 88
    %v57 = vadd.s32 %v45, 96
    %v58 = vadd.s32 %v45, 104
    %v59 = vadd.s32 %v45, 112
    %v60 = vadd.s32 %v45, 120
    %v61 = vlaneseq
    %v62 = vand.u32 %v61, 127
    %v63 = vmul.u32 %v62, 32
    %vm64 = vcmp.ge.s32.totalorder %v45, %v63
    %vm65 = vcmp.ge.s32.totalorder %v46, %v63
    %vm66 = vcmp.ge.s32.totalorder %v47, %v63
    %vm67 = vcmp.ge.s32.totalorder %v48, %v63
    %vm68 = vcmp.ge.s32.totalorder %v49, %v63
    %vm69 = vcmp.ge.s32.totalorder %v50, %v63
    %vm70 = vcmp.ge.s32.totalorder %v51, %v63
    %vm71 = vcmp.ge.s32.totalorder %v52, %v63
    %vm72 = vcmp.ge.s32.totalorder %v53, %v63
    %vm73 = vcmp.ge.s32.totalorder %v54, %v63
    %vm74 = vcmp.ge.s32.totalorder %v55, %v63
    %vm75 = vcmp.ge.s32.totalorder %v56, %v63
    %vm76 = vcmp.ge.s32.totalorder %v57, %v63
    %vm77 = vcmp.ge.s32.totalorder %v58, %v63
    %vm78 = vcmp.ge.s32.totalorder %v59, %v63
    %vm79 = vcmp.ge.s32.totalorder %v60, %v63
    %v80 = vadd.s32 %v62, 1
    %v81 = vmul.u32 %v80, 32
    %vm82 = vcmp.lt.s32.totalorder %v45, %v81
    %vm83 = vcmp.lt.s32.totalorder %v46, %v81
    %vm84 = vcmp.lt.s32.totalorder %v47, %v81
    %vm85 = vcmp.lt.s32.totalorder %v48, %v81
    %vm86 = vcmp.lt.s32.totalorder %v49, %v81
    %vm87 = vcmp.lt.s32.totalorder %v50, %v81
    %vm88 = vcmp.lt.s32.totalorder %v51, %v81
    %vm89 = vcmp.lt.s32.totalorder %v52, %v81
    %vm90 = vcmp.lt.s32.totalorder %v53, %v81
    %vm91 = vcmp.lt.s32.totalorder %v54, %v81
    %vm92 = vcmp.lt.s32.totalorder %v55, %v81
    %vm93 = vcmp.lt.s32.totalorder %v56, %v81
    %vm94 = vcmp.lt.s32.totalorder %v57, %v81
    %vm95 = vcmp.lt.s32.totalorder %v58, %v81
    %vm96 = vcmp.lt.s32.totalorder %v59, %v81
    %vm97 = vcmp.lt.s32.totalorder %v60, %v81
    %vm98 = vmand %vm64, %vm82
    %vm99 = vmand %vm65, %vm83
    %vm100 = vmand %vm66, %vm84
    %vm101 = vmand %vm67, %vm85
    %vm102 = vmand %vm68, %vm86
    %vm103 = vmand %vm69, %vm87
    %vm104 = vmand %vm70, %vm88
    %vm105 = vmand %vm71, %vm89
    %vm106 = vmand %vm72, %vm90
    %vm107 = vmand %vm73, %vm91
    %vm108 = vmand %vm74, %vm92
    %vm109 = vmand %vm75, %vm93
    %vm110 = vmand %vm76, %vm94
    %vm111 = vmand %vm77, %vm95
    %vm112 = vmand %vm78, %vm96
    %vm113 = vmand %vm79, %vm97
    %v114 = vsel %vm98, 1, 0
    %v115 = vsel %vm99, 1, 0
    %v116 = vsel %vm100, 1, 0
    %v117 = vsel %vm101, 1, 0
    %v118 = vsel %vm102, 1, 0
    %v119 = vsel %vm103, 1, 0
    %v120 = vsel %vm104, 1, 0
    %v121 = vsel %vm105, 1, 0
    %v122 = vsel %vm106, 1, 0
    %v123 = vsel %vm107, 1, 0
    %v124 = vsel %vm108, 1, 0
    %v125 = vsel %vm109, 1, 0
    %v126 = vsel %vm110, 1, 0
    %v127 = vsel %vm111, 1, 0
    %v128 = vsel %vm112, 1, 0
    %v129 = vsel %vm113, 1, 0
    %v130 = vcvt.s32.f32 %v114
    %v131 = vcvt.s32.f32 %v115
    %v132 = vcvt.s32.f32 %v116
    %v133 = vcvt.s32.f32 %v117
    %v134 = vcvt.s32.f32 %v118
    %v135 = vcvt.s32.f32 %v119
    %v136 = vcvt.s32.f32 %v120
    %v137 = vcvt.s32.f32 %v121
    %v138 = vcvt.s32.f32 %v122
    %v139 = vcvt.s32.f32 %v123
    %v140 = vcvt.s32.f32 %v124
    %v141 = vcvt.s32.f32 %v125
    %v142 = vcvt.s32.f32 %v126
    %v143 = vcvt.s32.f32 %v127
    %v144 = vcvt.s32.f32 %v128
    %v145 = vcvt.s32.f32 %v129
    %v146 = vmul.u32 %v45, 32
    %vm147 = vcmp.ge.s32.totalorder %v62, %v146
    %v148 = vadd.s32 %v45, 1
    %v149 = vmul.u32 %v148, 32
    %vm150 = vcmp.lt.s32.totalorder %v62, %v149
    %vm151 = vmand %vm147, %vm150
    %v152 = vsel %vm151, 1, 0
    %v153 = vcvt.s32.f32 %v152
    %154 = vmatpush.msra.mxu0 %v145
    %155 = vmatpush.msra.mxu0 %v144
    %156 = vmatpush.msra.mxu0 %v143
    %157 = vmatpush.msra.mxu0 %v142
    %158 = vmatpush.msra.mxu0 %v141
    %159 = vmatpush.msra.mxu0 %v140
    %160 = vmatpush.msra.mxu0 %v139
    %161 = vmatpush.msra.mxu0 %v138
    %162 = vmatpush.msra.mxu0 %v137
    %163 = vmatpush.msra.mxu0 %v136
    %164 = vmatpush.msra.mxu0 %v135
    %165 = vmatpush.msra.mxu0 %v134
    %166 = vmatpush.msra.mxu0 %v133
    %167 = vmatpush.msra.mxu0 %v132
    %168 = vmatpush.msra.mxu0 %v131
    %169 = vmatpush.msra.mxu0 %v130
    %170 = vmatmul.f32.gmra.mxu0 %v43
    %v171 = vpop.f32.mrf.mxu0
    %v172 = vadd.f32 0.0, %v171
    %173 = vdwg.mxu0
    %v174 = vmul.f32 %v172, 0.03125
    %vm175 = vcmask 31744
    %v177 = vsel %vm175, %v174, 0
    %vm179 = vcmask 1043456
    %v181 = vsel %vm179, %v153, 0
    %183 = vmatpush.msra.mxu0 0.0
    %184 = vmatpush.msra.mxu0 0.0
    %185 = vmatpush.msra.mxu0 0.0
    %186 = vmatpush.msra.mxu0 0.0
    %187 = vmatpush.msra.mxu0 0.0
    %188 = vmatpush.msra.mxu0 0.0
    %189 = vmatpush.msra.mxu0 0.0
    %190 = vmatpush.msra.mxu0 0.0
    %191 = vmatpush.msra.mxu0 0.0
    %192 = vmatpush.msra.mxu0 0.0
    %193 = vmatpush.msra.mxu0 0.0
    %194 = vmatpush.msra.mxu0 0.0
    %195 = vmatpush.msra.mxu0 0.0
    %196 = vmatpush.msra.mxu0 0.0
    %197 = vmatpush.msra.mxu0 0.0
    %198 = vmatpush.msra.mxu0 %v181
    %199 = vmatmul.f32.gmra.mxu0 %v177
    %v200 = vpop.f32.mrf.mxu0
    %v201 = vadd.f32 0.0, %v200
    %202 = vdwg.mxu0
    %v203 = vsub.f32 %v43, %v201
    %v204 = vmul.f32 %v203, %v203
    %205 = vmatpush.msra.mxu0 %v145
    %206 = vmatpush.msra.mxu0 %v144
    %207 = vmatpush.msra.mxu0 %v143
    %208 = vmatpush.msra.mxu0 %v142
    %209 = vmatpush.msra.mxu0 %v141
    %210 = vmatpush.msra.mxu0 %v140
    %211 = vmatpush.msra.mxu0 %v139
    %212 = vmatpush.msra.mxu0 %v138
    %213 = vmatpush.msra.mxu0 %v137
    %214 = vmatpush.msra.mxu0 %v136
    %215 = vmatpush.msra.mxu0 %v135
    %216 = vmatpush.msra.mxu0 %v134
    %217 = vmatpush.msra.mxu0 %v133
    %218 = vmatpush.msra.mxu0 %v132
    %219 = vmatpush.msra.mxu0 %v131
    %220 = vmatpush.msra.mxu0 %v130
    %221 = vmatmul.f32.gmra.mxu0 %v204
    %v222 = vpop.f32.mrf.mxu0
    %v223 = vadd.f32 0.0, %v222
    %224 = vdwg.mxu0
    %v225 = vmul.f32 %v223, 0.032258064
    %v226 = vrsqrt.pop %v225
    %v227 = vmul.f32 %v226, %v225
    %v228 = vmul.f32 %v227, %v226
    %v229 = vmul.f32 0.5, %v228
    %v230 = vsub.f32 1.5, %v229
    %v231 = vmul.f32 %v226, %v230
    %v232 = vmul.f32 %v225, %v231
    %vm233 = vcmp.eq.f32.partialorder %v225, inf
    %v234 = vsel %vm233, %v225, %v232
    %vm235 = vcmp.eq.f32.partialorder %v225, 0.0
    %v236 = vand.u32 %v225, 2147483648
    %v237 = vsel %vm235, %v236, %v234
    %v238 = vadd.f32 %v237, 1e-06
    %v239 = vrcp.pop %v238
    %v240 = vmul.f32 %v238, %v239
    %v241 = vsub.f32 2.0, %v240
    %v242 = vmul.f32 %v239, %v241
    %v243 = vmul.f32 %v238, %v242
    %v244 = vsub.f32 2.0, %v243
    %v245 = vmul.f32 %v242, %v244
    %v247 = vsel %vm175, %v245, 0
    %249 = vmatpush.msra.mxu0 0.0
    %250 = vmatpush.msra.mxu0 0.0
    %251 = vmatpush.msra.mxu0 0.0
    %252 = vmatpush.msra.mxu0 0.0
    %253 = vmatpush.msra.mxu0 0.0
    %254 = vmatpush.msra.mxu0 0.0
    %255 = vmatpush.msra.mxu0 0.0
    %256 = vmatpush.msra.mxu0 0.0
    %257 = vmatpush.msra.mxu0 0.0
    %258 = vmatpush.msra.mxu0 0.0
    %259 = vmatpush.msra.mxu0 0.0
    %260 = vmatpush.msra.mxu0 0.0
    %261 = vmatpush.msra.mxu0 0.0
    %262 = vmatpush.msra.mxu0 0.0
    %263 = vmatpush.msra.mxu0 0.0
    %264 = vmatpush.msra.mxu0 %v181
    %265 = vmatmul.f32.gmra.mxu0 %v247
    %v266 = vpop.f32.mrf.mxu0
    %v267 = vadd.f32 0.0, %v266
    %268 = vdwg.mxu0
    %v269 = vld [vmem:[#allocation5] sm:$0x1]
    %v270 = vld [vmem:[%s2] sm:$0x1]
    %v271 = vmul.f32 %v203, %v267
    %v273 = vperm.slane %v269, 0
    %v275 = vmul.f32 %v271, %v273
    %v277 = vperm.slane %v270, 0
    %v279 = vadd.f32 %v275, %v277
    %280 = vst [vmem:[#allocation7] sm:$0xf] %v279
    // Predicated region
    $region22: #{tpu_custom_call.1} parent=1 // pred_check
      _
    $region23: #{tpu_custom_call.1} parent=1 // pred_check_branch
      %282 = sbr.rel (0) target = $region25
    $region24: #{tpu_custom_call.1} parent=1 // pred_region
      %284 = vsyncadd [#allocation4], 0
      %s286 = sshll.u32 [#allocation7], 4
      %s287 = int_to_ptr.vmem [resolvable:$true] %s286
      %s288 = sshll.u32 %s3, 4
      %s289 = int_to_ptr.hbm [resolvable:$true] %s288
      %291 = dma.vmem_to_hbm [thread:$0]  %s287, 64, %s289, [#allocation4]
    $region25: #{tpu_custom_call.1} parent=1 // pred_fallthru
      _
    // Predicated region
    $region26: #{tpu_custom_call.1} parent=1 // pred_check
      _
    $region27: #{tpu_custom_call.1} parent=1 // pred_check_branch
      %293 = sbr.rel (0) target = $region29
    $region28: #{tpu_custom_call.1} parent=1 // pred_region
      %295 = dma.done [#allocation4], 64
    $region29: #{tpu_custom_call.1} parent=1 // pred_fallthru
      _
    %296 = vsyncpa [#allocation3], 1
    %297 = vsyncpa [#allocation6], 1
    %298 = vsyncpa [#allocation4], 1

</llo_original>
